<compile_context>
chip_gen: v5e
topology: v5e:2x2
jax: 0.10.0
libtpu: 0.0.40
codegen_flags: <defaults>
</compile_context>

<pallas_src>
import jax
import jax.numpy as jnp
from jax.experimental import pallas as pl
from jax.experimental.pallas import tpu as pltpu


# ----------------------------------------------------------------------------
# Tiled (M, K) @ (K, N) + bias GEMM -- used for the input and vocab projections.
# ----------------------------------------------------------------------------

def _matmul_bias_kernel(x_ref, w_ref, b_ref, o_ref):
    o_ref[...] = (jnp.dot(x_ref[...], w_ref[...],
                          preferred_element_type=jnp.float32)
                  + b_ref[...]).astype(o_ref.dtype)


def _pick_tile(dim, target, mult):
    """Largest tile <= target that divides dim and is sublane/lane friendly."""
    cands = [t for t in range(1, min(target, dim) + 1)
             if dim % t == 0 and (t % mult == 0 or t == dim)]
    return max(cands) if cands else dim


def matmul_bias(x, w, b, *, out_dtype=jnp.float32, tile_m=256, tile_n=512):
    """(M, K) @ (K, N) + b[1, N], tiled over M and N with a 'parallel' grid."""
    M, K = x.shape
    K2, N = w.shape
    assert K == K2 and b.shape == (1, N)
    tm = _pick_tile(M, tile_m, 8)
    tn = _pick_tile(N, tile_n, 128)
    grid = (M // tm, N // tn)

    return pl.pallas_call(
        _matmul_bias_kernel,
        out_shape=jax.ShapeDtypeStruct((M, N), out_dtype),
        grid_spec=pltpu.PrefetchScalarGridSpec(
            num_scalar_prefetch=0,
            grid=grid,
            in_specs=[
                pl.BlockSpec((tm, K), lambda i, j: (i, 0)),   # activations
                pl.BlockSpec((K, tn), lambda i, j: (0, j)),   # weight tile
                pl.BlockSpec((1, tn), lambda i, j: (0, j)),   # bias tile
            ],
            out_specs=pl.BlockSpec((tm, tn), lambda i, j: (i, j)),
        ),
        compiler_params=pltpu.CompilerParams(
            dimension_semantics=("parallel", "parallel")),
    )(x, w, b)


# ----------------------------------------------------------------------------
# LSTM recurrence kernel: grid over time chunks, h/c carried in VMEM scratch.
# ----------------------------------------------------------------------------

def _lstm_recurrence_kernel(xg_ref, h0_ref, c0_ref, whh_ref,
                            hidden_ref, hN_ref, cN_ref,
                            h_sc, c_sc):
    t = pl.program_id(0)
    TT = xg_ref.shape[1]          # static time-chunk length
    H = h_sc.shape[-1]

    # Initialize the recurrent state from prev_state on the first chunk.
    @pl.when(t == 0)
    def _():
        h_sc[...] = h0_ref[...]
        c_sc[...] = c0_ref[...]

    h = h_sc[...]                 # f32 state
    c = c_sc[...]
    whh = whh_ref[...]            # (H, 4H), hoisted out of the step loop

    # Static unroll over the chunk: one MXU matmul per step, everything else
    # is VPU/EUP work in f32.  xg already contains x @ W_ih^T + (b_ih + b_hh).
    for s in range(TT):
        gates = xg_ref[:, s, :] + jnp.dot(
            h.astype(whh.dtype), whh, preferred_element_type=jnp.float32)
        i_g = jax.nn.sigmoid(gates[:, 0 * H:1 * H])
        f_g = jax.nn.sigmoid(gates[:, 1 * H:2 * H])
        g_g = jnp.tanh(gates[:, 2 * H:3 * H])
        o_g = jax.nn.sigmoid(gates[:, 3 * H:4 * H])
        c = f_g * c + i_g * g_g
        h = o_g * jnp.tanh(c)
        hidden_ref[:, s, :] = h.astype(hidden_ref.dtype)

    h_sc[...] = h
    c_sc[...] = c

    # Final-state outputs: only written on the last grid step (resident blocks).
    @pl.when(t == pl.num_programs(0) - 1)
    def _():
        hN_ref[...] = h.astype(hN_ref.dtype)
        cN_ref[...] = c.astype(cN_ref.dtype)


def _pick_time_chunk(T, target=16):
    # Prefer a chunk that divides T and is a multiple of 8 (sublane tile) or the
    # full sequence; fall back to the whole sequence (blocks == full dims).
    cands = [tt for tt in range(1, min(target, T) + 1)
             if T % tt == 0 and (tt % 8 == 0 or tt == T)]
    return max(cands) if cands else T


def lstm_recurrence(xg, h0, c0, whh_t, *, hidden_dtype, time_chunk=16):
    """xg: (B, T, 4H) f32 precomputed input gates (bias folded in).
    h0, c0: (B, H) f32.  whh_t: (H, 4H).
    Returns hidden (B, T, H) hidden_dtype and final (hN, cN) each (B, H) f32."""
    B, T, G = xg.shape
    H = whh_t.shape[0]
    assert G == 4 * H
    TT = _pick_time_chunk(T, time_chunk)
    grid = (T // TT,)

    hidden, hN, cN = pl.pallas_call(
        _lstm_recurrence_kernel,
        out_shape=(
            jax.ShapeDtypeStruct((B, T, H), hidden_dtype),
            jax.ShapeDtypeStruct((B, H), jnp.float32),
            jax.ShapeDtypeStruct((B, H), jnp.float32),
        ),
        grid_spec=pltpu.PrefetchScalarGridSpec(
            num_scalar_prefetch=0,
            grid=grid,
            in_specs=[
                pl.BlockSpec((B, TT, 4 * H), lambda t: (0, t, 0)),   # xg chunk
                pl.BlockSpec((B, H), lambda t: (0, 0)),              # h0
                pl.BlockSpec((B, H), lambda t: (0, 0)),              # c0
                pl.BlockSpec((H, 4 * H), lambda t: (0, 0)),          # W_hh^T
            ],
            out_specs=[
                pl.BlockSpec((B, TT, H), lambda t: (0, t, 0)),       # hidden chunk
                pl.BlockSpec((B, H), lambda t: (0, 0)),              # h_n
                pl.BlockSpec((B, H), lambda t: (0, 0)),              # c_n
            ],
            scratch_shapes=[
                pltpu.VMEM((B, H), jnp.float32),                     # h carry
                pltpu.VMEM((B, H), jnp.float32),                     # c carry
            ],
        ),
        compiler_params=pltpu.CompilerParams(
            dimension_semantics=("arbitrary",)),                     # serial recurrence
    )(xg, h0, c0, whh_t)
    return hidden, hN, cN


# ----------------------------------------------------------------------------
# Module wrapper (mirrors RNNModule.forward).
# ----------------------------------------------------------------------------

def rnn_module_forward(params, tokens, prev_state, *,
                       compute_dtype=jnp.bfloat16, time_chunk=16):
    """tokens: (B, T) int32; prev_state: ((1, B, H), (1, B, H)) float32.
    Returns logits (B, T, V) float32 and (h_n, c_n) each (1, B, H) float32."""
    B, T = tokens.shape
    E = params["embedding"].shape[1]
    H = params["w_hh"].shape[1]
    V = params["w_dense"].shape[0]

    # Weight prep (layout plumbing so every kernel matmul is a plain x @ W).
    emb_tbl = params["embedding"].astype(compute_dtype)
    wih_t = params["w_ih"].T.astype(compute_dtype)                          # (E, 4H)
    whh_t = params["w_hh"].T.astype(compute_dtype)                          # (H, 4H)
    b_gates = (params["b_ih"] + params["b_hh"])[None, :].astype(jnp.float32)  # (1, 4H)
    wd_t = params["w_dense"].T.astype(compute_dtype)                        # (H, V)
    bd = params["b_dense"][None, :].astype(jnp.float32)                     # (1, V)

    h0 = prev_state[0][0].astype(jnp.float32)                               # (B, H)
    c0 = prev_state[1][0].astype(jnp.float32)                               # (B, H)

    # 1. Embedding gather (JAX glue; batch-first, no transposes anywhere).
    # TODO(synk): a data-dependent gather kernel is not worthwhile at these shapes.
    embed = jnp.take(emb_tbl, tokens, axis=0)                               # (B, T, E)

    # 2. Input projection for all tokens as one parallel GEMM (bias folded in).
    xg = matmul_bias(embed.reshape(B * T, E), wih_t, b_gates,
                     out_dtype=jnp.float32)                                 # (B*T, 4H)
    xg = xg.reshape(B, T, 4 * H)

    # 3. Serial LSTM recurrence (single h @ W_hh^T matmul per step).
    hidden, hN, cN = lstm_recurrence(xg, h0, c0, whh_t,
                                     hidden_dtype=compute_dtype,
                                     time_chunk=time_chunk)

    # 4. Vocab projection as one parallel GEMM.
    logits = matmul_bias(hidden.reshape(B * T, H), wd_t, bd,
                         out_dtype=jnp.float32)                             # (B*T, V)
    logits = logits.reshape(B, T, V)

    return logits, (hN[None, ...], cN[None, ...])


# ----------------------------------------------------------------------------
# Pure-JAX reference (semantics of nn.Embedding + nn.LSTM + nn.Linear).
# ----------------------------------------------------------------------------

def reference_forward(params, tokens, prev_state):
    embed = jnp.take(params["embedding"], tokens, axis=0)                   # (B, T, E)
    h0 = prev_state[0][0]
    c0 = prev_state[1][0]
    H = params["w_hh"].shape[1]

    def step(carry, x_t):
        h, c = carry
        gates = (x_t @ params["w_ih"].T + h @ params["w_hh"].T
                 + params["b_ih"] + params["b_hh"])
        i = jax.nn.sigmoid(gates[:, :H])
        f = jax.nn.sigmoid(gates[:, H:2 * H])
        g = jnp.tanh(gates[:, 2 * H:3 * H])
        o = jax.nn.sigmoid(gates[:, 3 * H:])
        c = f * c + i * g
        h = o * jnp.tanh(c)
        return (h, c), h

    (hN, cN), hs = jax.lax.scan(step, (h0, c0), jnp.transpose(embed, (1, 0, 2)))
    outputs = jnp.transpose(hs, (1, 0, 2))                                  # (B, T, H)
    logits = outputs @ params["w_dense"].T + params["b_dense"]
    return logits, (hN[None, ...], cN[None, ...])


def init_params(key, n_vocab, embedding_size, lstm_size):
    ks = jax.random.split(key, 7)
    s = 1.0 / float(lstm_size) ** 0.5

    def u(k, shape):
        return jax.random.uniform(k, shape, jnp.float32, -s, s)

    return {
        "embedding": jax.random.normal(ks[0], (n_vocab, embedding_size), jnp.float32),
        "w_ih": u(ks[1], (4 * lstm_size, embedding_size)),
        "w_hh": u(ks[2], (4 * lstm_size, lstm_size)),
        "b_ih": u(ks[3], (4 * lstm_size,)),
        "b_hh": u(ks[4], (4 * lstm_size,)),
        "w_dense": u(ks[5], (n_vocab, lstm_size)),
        "b_dense": u(ks[6], (n_vocab,)),
    }


if __name__ == "__main__":
    # Small, deterministic config (toy shapes; production shapes should use
    # B >= 8 and H, E, V multiples of 128 for lane-aligned gate slabs).
    n_vocab = 128
    seq_size = 8
    embedding_size = 32
    lstm_size = 32
    batch = 2

    key = jax.random.PRNGKey(0)
    k_params, k_tok = jax.random.split(key)

    params = init_params(k_params, n_vocab, embedding_size, lstm_size)
    tokens = jax.random.randint(k_tok, (batch, seq_size), 0, n_vocab, dtype=jnp.int32)

    # zero_state(batch)
    prev_state = (jnp.zeros((1, batch, lstm_size), jnp.float32),
                  jnp.zeros((1, batch, lstm_size), jnp.float32))

    ref_logits, (ref_h, ref_c) = reference_forward(params, tokens, prev_state)

    # Full-f32 path: tight semantics check against the reference.
    logits32, (h32, c32) = rnn_module_forward(params, tokens, prev_state,
                                              compute_dtype=jnp.float32)
    jax.block_until_ready((logits32, h32, c32))
    assert logits32.shape == (batch, seq_size, n_vocab)
    assert h32.shape == (1, batch, lstm_size) and c32.shape == (1, batch, lstm_size)
    assert jnp.allclose(logits32, ref_logits, rtol=1e-5, atol=1e-5)
    assert jnp.allclose(h32, ref_h, rtol=1e-5, atol=1e-5)
    assert jnp.allclose(c32, ref_c, rtol=1e-5, atol=1e-5)

    # Default bf16 matmul-operand path (MXU-friendly): loose tolerance.
    logits16, (h16, c16) = rnn_module_forward(params, tokens, prev_state)
    jax.block_until_ready((logits16, h16, c16))
    assert logits16.shape == (batch, seq_size, n_vocab)
    assert jnp.allclose(logits16, ref_logits, rtol=1e-1, atol=1e-1)
    assert jnp.allclose(h16, ref_h, rtol=1e-1, atol=1e-1)
    assert jnp.allclose(c16, ref_c, rtol=1e-1, atol=1e-1)

    print("KERNEL_OK")
</pallas_src>

<mosaic_0001>
module attributes {stable_mosaic.version = 11 : i64} {
  func.func @_matmul_bias_kernel(%arg0: i32, %arg1: i32, %arg2: memref<16x32xf32, #tpu.memory_space<vmem>>, %arg3: memref<32x128xf32, #tpu.memory_space<vmem>>, %arg4: memref<1x128xf32, #tpu.memory_space<vmem>>, %arg5: memref<16x128xf32, #tpu.memory_space<vmem>>) attributes {dimension_semantics = [#tpu.dimension_semantics<parallel>, #tpu.dimension_semantics<parallel>], iteration_bounds = array<i64: 1, 1>, scalar_prefetch = 0 : i64, scratch_operands = 0 : i64, tpu.core_type = #tpu.core_type<tc>, window_params = [{transform_indices = @transform_0, window_bounds = array<i64: 16, 32>}, {transform_indices = @transform_1, window_bounds = array<i64: 32, 128>}, {transform_indices = @transform_2, window_bounds = array<i64: 1, 128>}, {transform_indices = @transform_3, window_bounds = array<i64: 16, 128>}]} {
    %c0 = arith.constant 0 : index
    %c0_0 = arith.constant 0 : index
    %0 = vector.load %arg2[%c0, %c0_0] : memref<16x32xf32, #tpu.memory_space<vmem>>, vector<16x32xf32>
    %c0_1 = arith.constant 0 : index
    %c0_2 = arith.constant 0 : index
    %1 = vector.load %arg3[%c0_1, %c0_2] : memref<32x128xf32, #tpu.memory_space<vmem>>, vector<32x128xf32>
    %cst = arith.constant dense<0.000000e+00> : vector<16x128xf32>
    %2 = tpu.matmul %0, %1, %cst {dimension_numbers = #tpu.dot_dimension_numbers<[1], [0], [0], [1], [0, 0, 1, 1], [], []>} : vector<16x32xf32>, vector<32x128xf32>, vector<16x128xf32> -> vector<16x128xf32>
    %c0_3 = arith.constant 0 : index
    %c0_4 = arith.constant 0 : index
    %3 = vector.load %arg4[%c0_3, %c0_4] : memref<1x128xf32, #tpu.memory_space<vmem>>, vector<1x128xf32>
    %4 = vector.broadcast %3 : vector<1x128xf32> to vector<16x128xf32>
    %5 = arith.addf %2, %4 : vector<16x128xf32>
    %c0_5 = arith.constant 0 : index
    %c0_6 = arith.constant 0 : index
    %6 = vector.load %arg5[%c0_5, %c0_6] : memref<16x128xf32, #tpu.memory_space<vmem>>, vector<16x128xf32>
    tpu.vector_store %arg5[%c0_5, %c0_6], %5 {strides = array<i32>} : memref<16x128xf32, #tpu.memory_space<vmem>>, vector<16x128xf32>,
    return
  }
  func.func @transform_0(%arg0: i32, %arg1: i32) -> (i32, i32) {
    %c0_i32 = arith.constant 0 : i32
    %c0_i32_0 = arith.constant 0 : i32
    return %arg0, %c0_i32 : i32, i32
  }
  func.func @transform_1(%arg0: i32, %arg1: i32) -> (i32, i32) {
    %c0_i32 = arith.constant 0 : i32
    %c0_i32_0 = arith.constant 0 : i32
    return %c0_i32, %arg1 : i32, i32
  }
  func.func @transform_2(%arg0: i32, %arg1: i32) -> (i32, i32) {
    %c0_i32 = arith.constant 0 : i32
    %c0_i32_0 = arith.constant 0 : i32
    return %c0_i32, %arg1 : i32, i32
  }
  func.func @transform_3(%arg0: i32, %arg1: i32) -> (i32, i32) {
    %c0_i32 = arith.constant 0 : i32
    return %arg0, %arg1 : i32, i32
  }
}

</mosaic_0001>

<llo_original>
// kernel: tpu_custom_call.1
$region0: #{tpu_custom_call.1}
  #allocation0 [shape = 'u32[]', space=smem, size = 0x4, offset = 0x4, fixed_abs, tag = 'smem constant byte address 0x4 - core index']
  #allocation1 [shape = 'u32[72,128]{1,0:T(1,128)}', space=vmem, size = 0x9000, scoped, tag = 'internal scratch']
  %s0 = inlined_call_operand.hbm [shape: f32[16,32], index: 0, kind: input, shape index: {}]
  %s1 = inlined_call_operand.hbm [shape: f32[32,128], index: 1, kind: input, shape index: {}]
  %s2 = inlined_call_operand.vmem [shape: f32[1,128], index: 2, kind: input, shape index: {}]
  %s3 = inlined_call_operand.hbm [shape: f32[16,128], index: 3, kind: output, shape index: {}]
  %s4 = sld [smem:[#allocation0]]
  $region30: #{tpu_custom_call.1} parent=0
    _
  %s6 = ssub.s32 1, %s4
  %s7 = scalar_select 0, %s6, %s4
  $region1: #{tpu_custom_call.1} parent=0
    #allocation2 [shape = 'u8[8192]{0}', space=vmem, size = 0x2000, scoped, tag = 'input window, operand 0, single buffered']
    #allocation3 [shape = 's32[1]{0}', space=sflag, size = 0x4, scoped, tag = 'scoped memory for tpu_custom_call.1']
    #allocation4 [shape = 's32[1]{0}', space=sflag, size = 0x4, scoped, tag = 'scoped memory for tpu_custom_call.1']
    #allocation5 [shape = 'u8[16384]{0}', space=vmem, size = 0x4000, scoped, tag = 'input window, operand 1, single buffered']
    #allocation6 [shape = 's32[1]{0}', space=sflag, size = 0x4, scoped, tag = 'scoped memory for tpu_custom_call.1']
    #allocation7 [shape = 'u8[8192]{0}', space=vmem, size = 0x2000, scoped, tag = 'output window, operand 0, single buffered']
    %8 = vsyncpa [#allocation3], 0
    %9 = vsyncpa [#allocation6], 0
    %10 = vsyncpa [#allocation4], 0
    // Predicated region
    $region2: #{tpu_custom_call.1} parent=1 // pred_check
      _
    $region3: #{tpu_custom_call.1} parent=1 // pred_check_branch
      %12 = sbr.rel (0) target = $region5
    $region4: #{tpu_custom_call.1} parent=1 // pred_region
      %14 = vsyncadd [#allocation3], 0
      %s15 = sshll.u32 %s0, 4
      %s16 = int_to_ptr.hbm [resolvable:$true] %s15
      %s17 = sshll.u32 [#allocation2], 4
      %s18 = int_to_ptr.vmem [resolvable:$true] %s17
      %23 = dma.hbm_to_vmem [thread:$0]  %s16, 256, %s18, [#allocation3], 128, 128, 8
    $region5: #{tpu_custom_call.1} parent=1 // pred_fallthru
      _
    // Predicated region
    $region6: #{tpu_custom_call.1} parent=1 // pred_check
      _
    $region7: #{tpu_custom_call.1} parent=1 // pred_check_branch
      %25 = sbr.rel (0) target = $region9
    $region8: #{tpu_custom_call.1} parent=1 // pred_region
      %27 = vsyncadd [#allocation6], 0
      %s28 = sshll.u32 %s1, 4
      %s29 = int_to_ptr.hbm [resolvable:$true] %s28
      %s30 = sshll.u32 [#allocation5], 4
      %s31 = int_to_ptr.vmem [resolvable:$true] %s30
      %36 = dma.hbm_to_vmem [thread:$0]  %s29, 512, %s31, [#allocation6], 128, 128, 8
    $region9: #{tpu_custom_call.1} parent=1 // pred_fallthru
      _
    // Predicated region
    $region10: #{tpu_custom_call.1} parent=1 // pred_check
      _
    $region11: #{tpu_custom_call.1} parent=1 // pred_check_branch
      %38 = sbr.rel (0) target = $region13
    $region12: #{tpu_custom_call.1} parent=1 // pred_region
      _
    $region13: #{tpu_custom_call.1} parent=1 // pred_fallthru
      _
    // Predicated region
    $region14: #{tpu_custom_call.1} parent=1 // pred_check
      _
    $region15: #{tpu_custom_call.1} parent=1 // pred_check_branch
      %40 = sbr.rel (0) target = $region17
    $region16: #{tpu_custom_call.1} parent=1 // pred_region
      %42 = dma.done [#allocation3], 256
    $region17: #{tpu_custom_call.1} parent=1 // pred_fallthru
      _
    // Predicated region
    $region18: #{tpu_custom_call.1} parent=1 // pred_check
      _
    $region19: #{tpu_custom_call.1} parent=1 // pred_check_branch
      %44 = sbr.rel (0) target = $region21
    $region20: #{tpu_custom_call.1} parent=1 // pred_region
      %46 = dma.done [#allocation6], 512
    $region21: #{tpu_custom_call.1} parent=1 // pred_fallthru
      _
    %v47 = vld [vmem:[#allocation2] sm:$0xff]
    %v48 = vld [vmem:[#allocation2 + $0x8] sm:$0xff]
    %v49 = vld [vmem:[#allocation5] sm:$0xff]
    %v50 = vld [vmem:[#allocation5 + $0x8] sm:$0xff]
    %v51 = vld [vmem:[#allocation5 + $0x10] sm:$0xff]
    %v52 = vld [vmem:[#allocation5 + $0x18] sm:$0xff]
    %v53 = vld [vmem:[%s2] sm:$0x1]
    %v55 = vperm.slane %v53, 0
    %vm57 = vcmask 261120
    %v59 = vsel %vm57, %v47, 0
    %v62 = vsel %vm57, %v48, 0
    %64 = vmatpush.msra.mxu0 0.0
    %65 = vmatpush.msra.mxu0 0.0
    %66 = vmatpush.msra.mxu0 0.0
    %67 = vmatpush.msra.mxu0 0.0
    %68 = vmatpush.msra.mxu0 0.0
    %69 = vmatpush.msra.mxu0 0.0
    %70 = vmatpush.msra.mxu0 0.0
    %71 = vmatpush.msra.mxu0 0.0
    %72 = vmatpush.msra.mxu0 0.0
    %73 = vmatpush.msra.mxu0 0.0
    %74 = vmatpush.msra.mxu0 0.0
    %75 = vmatpush.msra.mxu0 0.0
    %76 = vmatpush.msra.mxu0 %v52
    %77 = vmatpush.msra.mxu0 %v51
    %78 = vmatpush.msra.mxu0 %v50
    %79 = vmatpush.msra.mxu0 %v49
    %80 = vmatmul.f32.gmra.mxu0 %v59
    %v81 = vpop.f32.mrf.mxu0
    %v82 = vadd.f32 %v55, %v81
    %83 = vmatmul.f32.gmra.mxu0 %v62
    %v84 = vpop.f32.mrf.mxu0
    %v85 = vadd.f32 %v55, %v84
    %86 = vdwg.mxu0
    %87 = vst [vmem:[#allocation7] sm:$0xff] %v82
    %88 = vst [vmem:[#allocation7 + $0x8] sm:$0xff] %v85
    // Predicated region
    $region22: #{tpu_custom_call.1} parent=1 // pred_check
      _
    $region23: #{tpu_custom_call.1} parent=1 // pred_check_branch
      %90 = sbr.rel (0) target = $region25
    $region24: #{tpu_custom_call.1} parent=1 // pred_region
      %92 = vsyncadd [#allocation4], 0
      %s93 = sshll.u32 [#allocation7], 4
      %s94 = int_to_ptr.vmem [resolvable:$true] %s93
      %s95 = sshll.u32 %s3, 4
      %s96 = int_to_ptr.hbm [resolvable:$true] %s95
      %101 = dma.vmem_to_hbm [thread:$0]  %s94, 256, %s96, [#allocation4], 128, 128, 8
    $region25: #{tpu_custom_call.1} parent=1 // pred_fallthru
      _
    // Predicated region
    $region26: #{tpu_custom_call.1} parent=1 // pred_check
      _
    $region27: #{tpu_custom_call.1} parent=1 // pred_check_branch
      %103 = sbr.rel (0) target = $region29
    $region28: #{tpu_custom_call.1} parent=1 // pred_region
      %105 = dma.done [#allocation4], 256
    $region29: #{tpu_custom_call.1} parent=1 // pred_fallthru
      _
    %106 = vsyncpa [#allocation3], 1
    %107 = vsyncpa [#allocation6], 1
    %108 = vsyncpa [#allocation4], 1

</llo_original>
